<compile_context>
chip_gen: v5e
topology: v5e:2x2
jax: 0.10.0
libtpu: 0.0.40
codegen_flags: <defaults>
</compile_context>

<pallas_src>
import numpy as np
import jax
import jax.numpy as jnp
from jax.experimental import pallas as pl
from jax.experimental.pallas import tpu as pltpu


# ----------------------------------------------------------------------------
# Pallas kernel: one grid step = one (graph, L-tile).  Computes the per-point
# MLP for that tile and writes the zero-padded dense block.
# ----------------------------------------------------------------------------
def pointnet_kernel(cnt_ref,                     # scalar prefetch: (B,) int32 in SMEM
                    x_ref,                       # (TILE_L, 3) f32 gathered coords
                    w1_ref, b1_ref,              # (3, 64) f32, (1, 64) f32
                    w2_ref, b2_ref,              # (64, 128) bf16, (1, 128) f32
                    w3_ref, b3_ref,              # (128, d) bf16, (1, d) f32
                    o_ref):                      # (TILE_L, d)
    b = pl.program_id(0)
    lt = pl.program_id(1)
    tile_l = o_ref.shape[0]
    tile_start = lt * tile_l
    cnt = cnt_ref[b]
    live = tile_start < cnt                      # any valid point in this tile?

    @pl.when(live)
    def _():
        x = x_ref[...].astype(jnp.float32)       # (TILE_L, 3)

        # ---- Layer 1 (K=3): three VPU FMAs instead of a lane-sparse MXU pass.
        h1 = (x[:, 0:1] * w1_ref[0:1, :]
              + x[:, 1:2] * w1_ref[1:2, :]
              + x[:, 2:3] * w1_ref[2:3, :]
              + b1_ref[...])
        h1 = jnp.maximum(h1, 0.0)

        # ---- Layers 2/3 on the MXU: bf16 operands, f32 accumulation.
        h2 = jnp.dot(h1.astype(jnp.bfloat16), w2_ref[...],
                     preferred_element_type=jnp.float32) + b2_ref[...]
        h2 = jnp.maximum(h2, 0.0)
        y = jnp.dot(h2.astype(jnp.bfloat16), w3_ref[...],
                    preferred_element_type=jnp.float32) + b3_ref[...]

        # ---- to_dense_batch: zero slots past this graph's point count.
        # Iota is offset by the tile start (per review correctness note).
        row = jax.lax.broadcasted_iota(jnp.int32, (tile_l, 1), 0) + tile_start
        valid = row < cnt
        o_ref[...] = jnp.where(valid, y, 0.0).astype(o_ref.dtype)

    @pl.when(jnp.logical_not(live))
    def _():
        # Tile entirely past the graph's point count: padding only, no MLP.
        o_ref[...] = jnp.zeros_like(o_ref)


# ----------------------------------------------------------------------------
# Pallas wrapper: (B, L_pad, 3) gathered coords -> (B, L_pad, d_embed) padded.
# ----------------------------------------------------------------------------
def pointnet_dense_mlp(pos_dense, counts, params, *, tile_l,
                       out_dtype=jnp.float32):
    w1, b1, w2, b2, w3, b3 = params
    B, L, _ = pos_dense.shape
    d_embed = w3.shape[1]
    assert tile_l % 8 == 0 and L % tile_l == 0, (tile_l, L)

    # bf16 copies of the MXU weights (activations cast in-kernel).
    w2_bf = w2.astype(jnp.bfloat16)
    w3_bf = w3.astype(jnp.bfloat16)

    out_bytes = jnp.dtype(out_dtype).itemsize
    flops = 2 * B * L * (3 * 64 + 64 * 128 + 128 * d_embed)
    bytes_accessed = (B * L * 3 * 4                         # coords in
                      + B * L * d_embed * out_bytes         # embeddings out
                      + (3 * 64 + 64 + 128 + d_embed) * 4   # f32 params
                      + (64 * 128 + 128 * d_embed) * 2)     # bf16 weights

    return pl.pallas_call(
        pointnet_kernel,
        out_shape=jax.ShapeDtypeStruct((B, L, d_embed), out_dtype),
        grid_spec=pltpu.PrefetchScalarGridSpec(
            num_scalar_prefetch=1,                          # counts -> SMEM
            grid=(B, L // tile_l),
            in_specs=[
                pl.BlockSpec((None, tile_l, 3), lambda b, l, cnt: (b, l, 0)),
                pl.BlockSpec((3, 64), lambda b, l, cnt: (0, 0)),          # W1
                pl.BlockSpec((1, 64), lambda b, l, cnt: (0, 0)),          # b1
                pl.BlockSpec((64, 128), lambda b, l, cnt: (0, 0)),        # W2 (bf16)
                pl.BlockSpec((1, 128), lambda b, l, cnt: (0, 0)),         # b2
                pl.BlockSpec((128, d_embed), lambda b, l, cnt: (0, 0)),   # W3 (bf16)
                pl.BlockSpec((1, d_embed), lambda b, l, cnt: (0, 0)),     # b3
            ],
            out_specs=pl.BlockSpec((None, tile_l, d_embed),
                                   lambda b, l, cnt: (b, l, 0)),
        ),
        compiler_params=pltpu.CompilerParams(
            dimension_semantics=("parallel", "parallel")),
        cost_estimate=pl.CostEstimate(
            flops=flops, transcendentals=0, bytes_accessed=bytes_accessed),
    )(counts, pos_dense, w1, b1, w2_bf, b2, w3_bf, b3)


# ----------------------------------------------------------------------------
# to_dense_batch index glue (pure indexing, no FLOPs).  `batch` must be a
# concrete, sorted graph-id vector — same contract as torch_geometric.
# ----------------------------------------------------------------------------
def _dense_batch_indices(batch, num_graphs, l_pad):
    batch_np = np.asarray(batch)
    assert batch_np.ndim == 1
    assert np.all(np.diff(batch_np) >= 0), "batch vector must be sorted"
    n = batch_np.shape[0]
    counts = np.bincount(batch_np, minlength=num_graphs).astype(np.int32)
    assert int(counts.max(initial=0)) <= l_pad
    ptr = np.concatenate([[0], np.cumsum(counts)[:-1]]).astype(np.int64)
    slots = np.arange(l_pad)
    gather_idx = ptr[:, None] + slots[None, :]                    # (B, L_pad)
    valid = slots[None, :] < counts[:, None]                      # (B, L_pad)
    gather_idx = np.where(valid, gather_idx, n).astype(np.int32)  # n -> zero row
    return counts, gather_idx, valid


def pointnet_backbone(pos, batch, num_graphs, params, *,
                      tile_l=1024, l_bucket=None, out_dtype=jnp.float32):
    """Returns (x_pad, mask) with L padded to a multiple of tile_l
    (== to_dense_batch(x, batch, max_num_nodes=L_pad))."""
    batch_np = np.asarray(batch)
    counts_np = np.bincount(batch_np, minlength=num_graphs).astype(np.int32)
    l_max = int(counts_np.max(initial=0))
    if l_bucket is None:
        l_pad = max(tile_l, tile_l * -(-l_max // tile_l))
    else:
        assert l_bucket % tile_l == 0 and l_bucket >= l_max
        l_pad = l_bucket

    counts, gather_idx, valid = _dense_batch_indices(batch, num_graphs, l_pad)
    # Pad on the cheap 3-wide input side; the kernel then writes the dense
    # (B, L_pad, d_embed) output directly (no second pass / scatter).
    pos_ext = jnp.concatenate(
        [pos, jnp.zeros((1, pos.shape[1]), pos.dtype)], axis=0)
    pos_dense = pos_ext[jnp.asarray(gather_idx)]                  # (B, L_pad, 3)
    x_pad = pointnet_dense_mlp(pos_dense, jnp.asarray(counts, jnp.int32),
                               params, tile_l=tile_l, out_dtype=out_dtype)
    mask = jnp.asarray(valid)
    return x_pad, mask


# ----------------------------------------------------------------------------
# Deterministic parameter init (PyTorch-Linear-style uniform).
# ----------------------------------------------------------------------------
def init_params(key, d_embed):
    def linear(key, fan_in, fan_out):
        kw, kb = jax.random.split(key)
        bound = 1.0 / np.sqrt(fan_in)
        w = jax.random.uniform(kw, (fan_in, fan_out), jnp.float32, -bound, bound)
        b = jax.random.uniform(kb, (1, fan_out), jnp.float32, -bound, bound)
        return w, b

    k1, k2, k3 = jax.random.split(key, 3)
    w1, b1 = linear(k1, 3, 64)
    w2, b2 = linear(k2, 64, 128)
    w3, b3 = linear(k3, 128, d_embed)
    return (w1, b1, w2, b2, w3, b3)


if __name__ == "__main__":
    key = jax.random.PRNGKey(0)
    k_pos, k_params = jax.random.split(key)

    # Small synthetic batch of point clouds: B=2 graphs, 7 + 9 = 16 points.
    B = 2
    N = 16
    D_EMBED = 256          # module default d_embed
    pos = jax.random.normal(k_pos, (N, 3), jnp.float32)
    batch = jnp.array([0] * 7 + [1] * 9, dtype=jnp.int32)

    params = init_params(k_params, D_EMBED)

    # Tiny tile/bucket so the test exercises: a live partially-valid tile,
    # a live fully-valid tile, and a dead (zero-only) tile.  Production
    # default is tile_l=1024 (fits v7x's 64 MiB VMEM with ample headroom).
    TILE_L = 8
    L_BUCKET = 16
    x_pad, mask = pointnet_backbone(pos, batch, B, params,
                                    tile_l=TILE_L, l_bucket=L_BUCKET)
    jax.block_until_ready((x_pad, mask))

    # Pure-JAX reference with the same precision choices as the kernel
    # (layer 1 exact f32 on VPU, layers 2/3 bf16 operands, f32 accumulation).
    w1, b1, w2, b2, w3, b3 = params
    h1 = (pos[:, 0:1] * w1[0:1] + pos[:, 1:2] * w1[1:2]
          + pos[:, 2:3] * w1[2:3] + b1)
    h1 = jnp.maximum(h1, 0.0)
    h2 = jnp.maximum(
        jnp.dot(h1.astype(jnp.bfloat16), w2.astype(jnp.bfloat16),
                preferred_element_type=jnp.float32) + b2, 0.0)
    y = jnp.dot(h2.astype(jnp.bfloat16), w3.astype(jnp.bfloat16),
                preferred_element_type=jnp.float32) + b3

    _, gather_idx, valid = _dense_batch_indices(batch, B, L_BUCKET)
    y_ext = jnp.concatenate([y, jnp.zeros((1, D_EMBED), y.dtype)], axis=0)
    ref_pad = jnp.where(jnp.asarray(valid)[..., None],
                        y_ext[jnp.asarray(gather_idx)], 0.0)
    ref_mask = jnp.asarray(valid)

    assert x_pad.shape == (B, L_BUCKET, D_EMBED), x_pad.shape
    assert mask.shape == (B, L_BUCKET), mask.shape
    np.testing.assert_allclose(np.asarray(x_pad), np.asarray(ref_pad),
                               rtol=2e-3, atol=2e-3)
    # Padded rows (including the entirely-dead second tile of graph 0) are 0.
    np.testing.assert_array_equal(
        np.asarray(x_pad)[~np.asarray(valid)], 0.0)
    np.testing.assert_array_equal(np.asarray(mask), np.asarray(ref_mask))

    print("KERNEL_OK")
</pallas_src>

<mosaic_0001>
module attributes {stable_mosaic.version = 11 : i64} {
  func.func @pointnet_kernel(%arg0: i32, %arg1: i32, %arg2: memref<2xi32, #tpu.memory_space<smem>>, %arg3: memref<1x8x3xf32, #tpu.memory_space<vmem>>, %arg4: memref<3x64xf32, #tpu.memory_space<vmem>>, %arg5: memref<1x64xf32, #tpu.memory_space<vmem>>, %arg6: memref<64x128xbf16, #tpu.memory_space<vmem>>, %arg7: memref<1x128xf32, #tpu.memory_space<vmem>>, %arg8: memref<128x256xbf16, #tpu.memory_space<vmem>>, %arg9: memref<1x256xf32, #tpu.memory_space<vmem>>, %arg10: memref<1x8x256xf32, #tpu.memory_space<vmem>>) attributes {dimension_semantics = [#tpu.dimension_semantics<parallel>, #tpu.dimension_semantics<parallel>], iteration_bounds = array<i64: 2, 2>, scalar_prefetch = 1 : i64, scratch_operands = 0 : i64, tpu.core_type = #tpu.core_type<tc>, window_params = [{transform_indices = @transform_0, window_bounds = array<i64: 1, 8, 3>}, {pipeline_mode = #tpu.pipeline_mode<synchronous>, transform_indices = @transform_1, window_bounds = array<i64: 3, 64>}, {pipeline_mode = #tpu.pipeline_mode<synchronous>, transform_indices = @transform_2, window_bounds = array<i64: 1, 64>}, {pipeline_mode = #tpu.pipeline_mode<synchronous>, transform_indices = @transform_3, window_bounds = array<i64: 64, 128>}, {pipeline_mode = #tpu.pipeline_mode<synchronous>, transform_indices = @transform_4, window_bounds = array<i64: 1, 128>}, {pipeline_mode = #tpu.pipeline_mode<synchronous>, transform_indices = @transform_5, window_bounds = array<i64: 128, 256>}, {pipeline_mode = #tpu.pipeline_mode<synchronous>, transform_indices = @transform_6, window_bounds = array<i64: 1, 256>}, {transform_indices = @transform_7, window_bounds = array<i64: 1, 8, 256>}]} {
    %c8_i32 = arith.constant 8 : i32
    %0 = arith.muli %arg1, %c8_i32 : i32
    %1 = arith.index_cast %arg0 : i32 to index
    %2 = memref.load %arg2[%1] : memref<2xi32, #tpu.memory_space<smem>>
    %3 = arith.cmpi slt, %0, %2 : i32
    %4 = arith.extui %3 : i1 to i32
    %c0_i32 = arith.constant 0 : i32
    %5 = arith.cmpi ne, %4, %c0_i32 : i32
    scf.if %5 {
      %c0 = arith.constant 0 : index
      %c0_1 = arith.constant 0 : index
      %c0_2 = arith.constant 0 : index
      %9 = vector.load %arg3[%c0, %c0_1, %c0_2] : memref<1x8x3xf32, #tpu.memory_space<vmem>>, vector<1x8x3xf32>
      %10 = vector.shape_cast %9 : vector<1x8x3xf32> to vector<8x3xf32>
      %11 = vector.extract_strided_slice %10 {offsets = [0, 0], sizes = [8, 1], strides = [1, 1]} : vector<8x3xf32> to vector<8x1xf32>
      %c0_3 = arith.constant 0 : index
      %c0_4 = arith.constant 0 : index
      %12 = vector.load %arg4[%c0_3, %c0_4] : memref<3x64xf32, #tpu.memory_space<vmem>>, vector<1x64xf32>
      %13 = vector.broadcast %11 : vector<8x1xf32> to vector<8x64xf32>
      %14 = vector.broadcast %12 : vector<1x64xf32> to vector<8x64xf32>
      %15 = arith.mulf %13, %14 : vector<8x64xf32>
      %16 = vector.extract_strided_slice %10 {offsets = [0, 1], sizes = [8, 1], strides = [1, 1]} : vector<8x3xf32> to vector<8x1xf32>
      %c1 = arith.constant 1 : index
      %c0_5 = arith.constant 0 : index
      %17 = vector.load %arg4[%c1, %c0_5] : memref<3x64xf32, #tpu.memory_space<vmem>>, vector<1x64xf32>
      %18 = vector.broadcast %16 : vector<8x1xf32> to vector<8x64xf32>
      %19 = vector.broadcast %17 : vector<1x64xf32> to vector<8x64xf32>
      %20 = arith.mulf %18, %19 : vector<8x64xf32>
      %21 = arith.addf %15, %20 : vector<8x64xf32>
      %22 = vector.extract_strided_slice %10 {offsets = [0, 2], sizes = [8, 1], strides = [1, 1]} : vector<8x3xf32> to vector<8x1xf32>
      %c2 = arith.constant 2 : index
      %c0_6 = arith.constant 0 : index
      %23 = vector.load %arg4[%c2, %c0_6] : memref<3x64xf32, #tpu.memory_space<vmem>>, vector<1x64xf32>
      %24 = vector.broadcast %22 : vector<8x1xf32> to vector<8x64xf32>
      %25 = vector.broadcast %23 : vector<1x64xf32> to vector<8x64xf32>
      %26 = arith.mulf %24, %25 : vector<8x64xf32>
      %27 = arith.addf %21, %26 : vector<8x64xf32>
      %c0_7 = arith.constant 0 : index
      %c0_8 = arith.constant 0 : index
      %28 = vector.load %arg5[%c0_7, %c0_8] : memref<1x64xf32, #tpu.memory_space<vmem>>, vector<1x64xf32>
      %29 = vector.broadcast %28 : vector<1x64xf32> to vector<8x64xf32>
      %30 = arith.addf %27, %29 : vector<8x64xf32>
      %cst = arith.constant 0.000000e+00 : f32
      %31 = vector.broadcast %cst : f32 to vector<8x64xf32>
      %32 = arith.maximumf %30, %31 : vector<8x64xf32>
      %33 = arith.truncf %32 : vector<8x64xf32> to vector<8x64xbf16>
      %c0_9 = arith.constant 0 : index
      %c0_10 = arith.constant 0 : index
      %34 = vector.load %arg6[%c0_9, %c0_10] : memref<64x128xbf16, #tpu.memory_space<vmem>>, vector<64x128xbf16>
      %cst_11 = arith.constant dense<0.000000e+00> : vector<8x128xf32>
      %35 = tpu.matmul %33, %34, %cst_11 {dimension_numbers = #tpu.dot_dimension_numbers<[1], [0], [0], [1], [0, 0, 1, 1], [], []>} : vector<8x64xbf16>, vector<64x128xbf16>, vector<8x128xf32> -> vector<8x128xf32>
      %c0_12 = arith.constant 0 : index
      %c0_13 = arith.constant 0 : index
      %36 = vector.load %arg7[%c0_12, %c0_13] : memref<1x128xf32, #tpu.memory_space<vmem>>, vector<1x128xf32>
      %37 = vector.broadcast %36 : vector<1x128xf32> to vector<8x128xf32>
      %38 = arith.addf %35, %37 : vector<8x128xf32>
      %cst_14 = arith.constant 0.000000e+00 : f32
      %39 = vector.broadcast %cst_14 : f32 to vector<8x128xf32>
      %40 = arith.maximumf %38, %39 : vector<8x128xf32>
      %41 = arith.truncf %40 : vector<8x128xf32> to vector<8x128xbf16>
      %c0_15 = arith.constant 0 : index
      %c0_16 = arith.constant 0 : index
      %42 = vector.load %arg8[%c0_15, %c0_16] : memref<128x256xbf16, #tpu.memory_space<vmem>>, vector<128x256xbf16>
      %cst_17 = arith.constant dense<0.000000e+00> : vector<8x256xf32>
      %43 = tpu.matmul %41, %42, %cst_17 {dimension_numbers = #tpu.dot_dimension_numbers<[1], [0], [0], [1], [0, 0, 1, 1], [], []>} : vector<8x128xbf16>, vector<128x256xbf16>, vector<8x256xf32> -> vector<8x256xf32>
      %c0_18 = arith.constant 0 : index
      %c0_19 = arith.constant 0 : index
      %44 = vector.load %arg9[%c0_18, %c0_19] : memref<1x256xf32, #tpu.memory_space<vmem>>, vector<1x256xf32>
      %45 = vector.broadcast %44 : vector<1x256xf32> to vector<8x256xf32>
      %46 = arith.addf %43, %45 : vector<8x256xf32>
      %47 = tpu.iota {dimensions = array<i32: 0>} : vector<8x1xi32>
      %48 = vector.broadcast %0 : i32 to vector<8x1xi32>
      %49 = arith.addi %47, %48 : vector<8x1xi32>
      %50 = vector.broadcast %2 : i32 to vector<8x1xi32>
      %51 = arith.cmpi slt, %49, %50 : vector<8x1xi32>
      %cst_20 = arith.constant 0.000000e+00 : f32
      %52 = vector.shape_cast %51 : vector<8x1xi1> to vector<8x1xi1>
      %53 = vector.broadcast %52 : vector<8x1xi1> to vector<8x256xi1>
      %54 = vector.broadcast %cst_20 : f32 to vector<8x256xf32>
      %55 = arith.select %53, %46, %54 : vector<8x256xi1>, vector<8x256xf32>
      %c0_21 = arith.constant 0 : index
      %c0_22 = arith.constant 0 : index
      %c0_23 = arith.constant 0 : index
      %56 = vector.load %arg10[%c0_21, %c0_22, %c0_23] : memref<1x8x256xf32, #tpu.memory_space<vmem>>, vector<1x8x256xf32>
      %57 = vector.shape_cast %56 : vector<1x8x256xf32> to vector<8x256xf32>
      %58 = vector.shape_cast %55 : vector<8x256xf32> to vector<1x8x256xf32>
      tpu.vector_store %arg10[%c0_21, %c0_22, %c0_23], %58 {strides = array<i32>} : memref<1x8x256xf32, #tpu.memory_space<vmem>>, vector<1x8x256xf32>,
    } else {
    }
    %true = arith.constant true
    %6 = arith.xori %3, %true : i1
    %7 = arith.extui %6 : i1 to i32
    %c0_i32_0 = arith.constant 0 : i32
    %8 = arith.cmpi ne, %7, %c0_i32_0 : i32
    scf.if %8 {
      %cst = arith.constant 0.000000e+00 : f32
      %9 = vector.broadcast %cst : f32 to vector<8x256xf32>
      %c0 = arith.constant 0 : index
      %c0_1 = arith.constant 0 : index
      %c0_2 = arith.constant 0 : index
      %10 = vector.load %arg10[%c0, %c0_1, %c0_2] : memref<1x8x256xf32, #tpu.memory_space<vmem>>, vector<1x8x256xf32>
      %11 = vector.shape_cast %10 : vector<1x8x256xf32> to vector<8x256xf32>
      %12 = vector.shape_cast %9 : vector<8x256xf32> to vector<1x8x256xf32>
      tpu.vector_store %arg10[%c0, %c0_1, %c0_2], %12 {strides = array<i32>} : memref<1x8x256xf32, #tpu.memory_space<vmem>>, vector<1x8x256xf32>,
    } else {
    }
    return
  }
  func.func @transform_0(%arg0: i32, %arg1: i32, %arg2: memref<2xi32, #tpu.memory_space<smem>>) -> (i32, i32, i32) {
    %c0_i32 = arith.constant 0 : i32
    %c0_i32_0 = arith.constant 0 : i32
    return %arg0, %arg1, %c0_i32 : i32, i32, i32
  }
  func.func @transform_1(%arg0: i32, %arg1: i32, %arg2: memref<2xi32, #tpu.memory_space<smem>>) -> (i32, i32) {
    %c0_i32 = arith.constant 0 : i32
    %c0_i32_0 = arith.constant 0 : i32
    %c0_i32_1 = arith.constant 0 : i32
    return %c0_i32, %c0_i32_0 : i32, i32
  }
  func.func @transform_2(%arg0: i32, %arg1: i32, %arg2: memref<2xi32, #tpu.memory_space<smem>>) -> (i32, i32) {
    %c0_i32 = arith.constant 0 : i32
    %c0_i32_0 = arith.constant 0 : i32
    %c0_i32_1 = arith.constant 0 : i32
    return %c0_i32, %c0_i32_0 : i32, i32
  }
  func.func @transform_3(%arg0: i32, %arg1: i32, %arg2: memref<2xi32, #tpu.memory_space<smem>>) -> (i32, i32) {
    %c0_i32 = arith.constant 0 : i32
    %c0_i32_0 = arith.constant 0 : i32
    %c0_i32_1 = arith.constant 0 : i32
    return %c0_i32, %c0_i32_0 : i32, i32
  }
  func.func @transform_4(%arg0: i32, %arg1: i32, %arg2: memref<2xi32, #tpu.memory_space<smem>>) -> (i32, i32) {
    %c0_i32 = arith.constant 0 : i32
    %c0_i32_0 = arith.constant 0 : i32
    %c0_i32_1 = arith.constant 0 : i32
    return %c0_i32, %c0_i32_0 : i32, i32
  }
  func.func @transform_5(%arg0: i32, %arg1: i32, %arg2: memref<2xi32, #tpu.memory_space<smem>>) -> (i32, i32) {
    %c0_i32 = arith.constant 0 : i32
    %c0_i32_0 = arith.constant 0 : i32
    %c0_i32_1 = arith.constant 0 : i32
    return %c0_i32, %c0_i32_0 : i32, i32
  }
  func.func @transform_6(%arg0: i32, %arg1: i32, %arg2: memref<2xi32, #tpu.memory_space<smem>>) -> (i32, i32) {
    %c0_i32 = arith.constant 0 : i32
    %c0_i32_0 = arith.constant 0 : i32
    %c0_i32_1 = arith.constant 0 : i32
    return %c0_i32, %c0_i32_0 : i32, i32
  }
  func.func @transform_7(%arg0: i32, %arg1: i32, %arg2: memref<2xi32, #tpu.memory_space<smem>>) -> (i32, i32, i32) {
    %c0_i32 = arith.constant 0 : i32
    %c0_i32_0 = arith.constant 0 : i32
    return %arg0, %arg1, %c0_i32 : i32, i32, i32
  }
}

</mosaic_0001>

<llo_original>
// kernel: tpu_custom_call.1
$region0: #{tpu_custom_call.1}
  #allocation0 [shape = 'u32[]', space=smem, size = 0x4, offset = 0x4, fixed_abs, tag = 'smem constant byte address 0x4 - core index']
  #allocation1 [shape = 'u32[72,128]{1,0:T(1,128)}', space=vmem, size = 0x9000, scoped, tag = 'internal scratch']
  #allocation2 [shape = 's32[1]{0}', space=sflag, size = 0x4, scoped, tag = 'scoped memory for tpu_custom_call.1']
  #allocation3 [shape = 'u8[512]{0}', space=smem, size = 0x200, scoped, tag = 'prefetched SMEM operand 0']
  %s0 = inlined_call_operand.vmem [shape: s32[2], index: 0, kind: input, shape index: {}]
  %s1 = inlined_call_operand.vmem [shape: f32[2,16,3], index: 1, kind: input, shape index: {}]
  %s2 = inlined_call_operand.vmem [shape: f32[3,64], index: 2, kind: input, shape index: {}]
  %s3 = inlined_call_operand.vmem [shape: f32[1,64], index: 3, kind: input, shape index: {}]
  %s4 = inlined_call_operand.vmem [shape: bf16[64,128], index: 4, kind: input, shape index: {}]
  %s5 = inlined_call_operand.vmem [shape: f32[1,128], index: 5, kind: input, shape index: {}]
  %s6 = inlined_call_operand.hbm [shape: bf16[128,256], index: 6, kind: input, shape index: {}]
  %s7 = inlined_call_operand.vmem [shape: f32[1,256], index: 7, kind: input, shape index: {}]
  %s8 = inlined_call_operand.hbm [shape: f32[2,16,256], index: 8, kind: output, shape index: {}]
  %s9 = sld [smem:[#allocation0]]
  $region73: #{tpu_custom_call.1} parent=0
    _
  %s11 = ssub.s32 1, %s9
  %s12 = scalar_select 0, %s11, %s9
  %s14 = sshll.u32 %s0, 4
  %s15 = int_to_ptr.vmem [resolvable:$true] %s14
  %17 = dma.vmem_to_smem %s15, 16, [#allocation3], [#allocation2]
  %19 = dma.done [#allocation2], 16
  %20 = sfence
  $region1: #{tpu_custom_call.1} parent=0
    #allocation4 [shape = 'u8[65536]{0}', space=vmem, size = 0x10000, scoped, tag = 'input window, operand 6, single buffered']
    #allocation5 [shape = 's32[2]{0}', space=sflag, size = 0x8, scoped, tag = 'scoped memory for tpu_custom_call.1']
    #allocation6 [shape = 's32[2]{0}', space=sflag, size = 0x8, scoped, tag = 'scoped memory for tpu_custom_call.1']
    #allocation7 [shape = 'u8[16384]{0}', space=vmem, size = 0x4000, scoped, tag = 'output window, operand 0']
    %21 = vsyncpa [#allocation5], 0
    %22 = vsyncpa [#allocation6], 0
    %s23 = scalar_lea.sflag [#allocation6], 1
    %24 = vsyncpa %s23, 0
    loop: start=0, step=1, limit=6
    $region2: #{tpu_custom_call.1} parent=1 // loop_pre_header
      _
    $region3: #{tpu_custom_call.1} parent=1 // loop_header
      %s26 = sphi 0, %s30
      %p27 = scmp.ge.s32.totalorder %s26, 6
      %s33 = sphi 0, %s45
      %s34 = sphi 0, %s41
      %s35 = sphi 0, %s33
      %s36 = sphi 0, %s34
      %s37 = sphi 0, %s35
      %s38 = sphi 0, %s36
      %s50 = sphi 0, %s52
      %s53 = sphi 0, %s50
      %s54 = sphi 0, %s53
      %s70 = sphi 0, %s54
      %s74 = sphi 0, %s74
      %s76 = sphi 0, %s74
      %s77 = sphi 0, %s76
      %s91 = sphi 0, %s77
      %s95 = sphi 0, %s95
      %s97 = sphi 0, %s95
      %s98 = sphi 0, %s97
      %s112 = sphi 0, %s98
      %s116 = sphi 0, %s116
      %s118 = sphi 0, %s116
      %s119 = sphi 0, %s118
      %s133 = sphi 0, %s119
      %s137 = sphi 0, %s137
      %s139 = sphi 0, %s137
      %s140 = sphi 0, %s139
      %s154 = sphi 0, %s140
      %s158 = sphi 0, %s158
      %s160 = sphi 0, %s158
      %s161 = sphi 0, %s160
      %s175 = sphi 0, %s161
      %s179 = sphi 0, %s179
      %s181 = sphi 0, %s179
      %s182 = sphi 0, %s181
      %s196 = sphi 0, %s182
      %s204 = sphi 0, %s206
      %s207 = sphi 0, %s204
      %s208 = sphi 0, %s207
      %s224 = sphi 0, %s208
    $region4: #{tpu_custom_call.1} parent=1 // loop_header_branch
      %29 = sbr.rel (%p27) target = $region8
    $region5: #{tpu_custom_call.1} parent=1 // loop_body
      %s31 = ssub.s32 %s26, 1
      %s32 = ssub.s32 %s26, 2
      %s39 = sadd.s32 1, %s34
      %p40 = scmp.ge.s32.totalorder %s39, 2
      %s41 = scalar_select %p40, 0, %s39
      %s42 = sadd.s32 1, %s33
      %s43 = scalar_select %p40, %s42, %s33
      %p44 = scmp.ge.s32.totalorder %s43, 2
      %s45 = scalar_select %p44, 0, %s43
      %s46 = ssub.s32 %s33, %s45
      %s47 = ssub.s32 %s34, %s41
      %s48 = sor.u32 %s46, %s47
      %p49 = scmp.eq.s32.totalorder %s48, 0
      %s51 = sadd.s32 %s50, 1
      %s52 = scalar_select %p49, %s50, %s51
      %p55 = pneg %p49
      %p56 = scmp.eq.s32.totalorder %s26, 3
      %p57 = por %p55, %p56
      %p58 = scmp.ne.s32.totalorder %s50, %s53
      %p59 = scmp.eq.s32.totalorder %s26, 0
      %p60 = por %p58, %p59
      %p61 = scmp.ne.s32.totalorder %s50, %s53
      %p62 = scmp.eq.s32.totalorder %s31, 3
      %p63 = por %p61, %p62
      %p64 = scmp.ne.s32.totalorder %s53, %s54
      %p65 = scmp.eq.s32.totalorder %s31, 0
      %p66 = por %p64, %p65
      %p67 = scmp.ne.s32.totalorder %s53, %s54
      %p68 = scmp.eq.s32.totalorder %s32, 3
      %p69 = por %p67, %p68
      %p71 = scmp.ne.s32.totalorder %s54, %s70
      %p72 = scmp.eq.s32.totalorder %s32, 0
      %p73 = por %p71, %p72
      %s75 = sadd.s32 %s74, 1
      %p78 = scmp.eq.s32.totalorder %s26, 3
      %p79 = scmp.ne.s32.totalorder %s74, %s76
      %p80 = scmp.eq.s32.totalorder %s26, 0
      %p81 = por %p79, %p80
      %p82 = scmp.ne.s32.totalorder %s74, %s76
      %p83 = scmp.eq.s32.totalorder %s31, 3
      %p84 = por %p82, %p83
      %p85 = scmp.ne.s32.totalorder %s76, %s77
      %p86 = scmp.eq.s32.totalorder %s31, 0
      %p87 = por %p85, %p86
      %p88 = scmp.ne.s32.totalorder %s76, %s77
      %p89 = scmp.eq.s32.totalorder %s32, 3
      %p90 = por %p88, %p89
      %p92 = scmp.ne.s32.totalorder %s77, %s91
      %p93 = scmp.eq.s32.totalorder %s32, 0
      %p94 = por %p92, %p93
      %s96 = sadd.s32 %s95, 1
      %p99 = scmp.eq.s32.totalorder %s26, 3
      %p100 = scmp.ne.s32.totalorder %s95, %s97
      %p101 = scmp.eq.s32.totalorder %s26, 0
      %p102 = por %p100, %p101
      %p103 = scmp.ne.s32.totalorder %s95, %s97
      %p104 = scmp.eq.s32.totalorder %s31, 3
      %p105 = por %p103, %p104
      %p106 = scmp.ne.s32.totalorder %s97, %s98
      %p107 = scmp.eq.s32.totalorder %s31, 0
      %p108 = por %p106, %p107
      %p109 = scmp.ne.s32.totalorder %s97, %s98
      %p110 = scmp.eq.s32.totalorder %s32, 3
      %p111 = por %p109, %p110
      %p113 = scmp.ne.s32.totalorder %s98, %s112
      %p114 = scmp.eq.s32.totalorder %s32, 0
      %p115 = por %p113, %p114
      %s117 = sadd.s32 %s116, 1
      %p120 = scmp.eq.s32.totalorder %s26, 3
      %p121 = scmp.ne.s32.totalorder %s116, %s118
      %p122 = scmp.eq.s32.totalorder %s26, 0
      %p123 = por %p121, %p122
      %p124 = scmp.ne.s32.totalorder %s116, %s118
      %p125 = scmp.eq.s32.totalorder %s31, 3
      %p126 = por %p124, %p125
      %p127 = scmp.ne.s32.totalorder %s118, %s119
      %p128 = scmp.eq.s32.totalorder %s31, 0
      %p129 = por %p127, %p128
      %p130 = scmp.ne.s32.totalorder %s118, %s119
      %p131 = scmp.eq.s32.totalorder %s32, 3
      %p132 = por %p130, %p131
      %p134 = scmp.ne.s32.totalorder %s119, %s133
      %p135 = scmp.eq.s32.totalorder %s32, 0
      %p136 = por %p134, %p135
      %s138 = sadd.s32 %s137, 1
      %p141 = scmp.eq.s32.totalorder %s26, 3
      %p142 = scmp.ne.s32.totalorder %s137, %s139
      %p143 = scmp.eq.s32.totalorder %s26, 0
      %p144 = por %p142, %p143
      %p145 = scmp.ne.s32.totalorder %s137, %s139
      %p146 = scmp.eq.s32.totalorder %s31, 3
      %p147 = por %p145, %p146
      %p148 = scmp.ne.s32.totalorder %s139, %s140
      %p149 = scmp.eq.s32.totalorder %s31, 0
      %p150 = por %p148, %p149
      %p151 = scmp.ne.s32.totalorder %s139, %s140
      %p152 = scmp.eq.s32.totalorder %s32, 3
      %p153 = por %p151, %p152
      %p155 = scmp.ne.s32.totalorder %s140, %s154
      %p156 = scmp.eq.s32.totalorder %s32, 0
      %p157 = por %p155, %p156
      %s159 = sadd.s32 %s158, 1
      %p162 = scmp.eq.s32.totalorder %s26, 3
      %p163 = scmp.ne.s32.totalorder %s158, %s160
      %p164 = scmp.eq.s32.totalorder %s26, 0
      %p165 = por %p163, %p164
      %p166 = scmp.ne.s32.totalorder %s158, %s160
      %p167 = scmp.eq.s32.totalorder %s31, 3
      %p168 = por %p166, %p167
      %p169 = scmp.ne.s32.totalorder %s160, %s161
      %p170 = scmp.eq.s32.totalorder %s31, 0
      %p171 = por %p169, %p170
      %p172 = scmp.ne.s32.totalorder %s160, %s161
      %p173 = scmp.eq.s32.totalorder %s32, 3
      %p174 = por %p172, %p173
      %p176 = scmp.ne.s32.totalorder %s161, %s175
      %p177 = scmp.eq.s32.totalorder %s32, 0
      %p178 = por %p176, %p177
      %s180 = sadd.s32 %s179, 1
      %p183 = scmp.eq.s32.totalorder %s26, 3
      %p184 = scmp.ne.s32.totalorder %s179, %s181
      %p185 = scmp.eq.s32.totalorder %s26, 0
      %p186 = por %p184, %p185
      %p187 = scmp.ne.s32.totalorder %s179, %s181
      %p188 = scmp.eq.s32.totalorder %s31, 3
      %p189 = por %p187, %p188
      %p190 = scmp.ne.s32.totalorder %s181, %s182
      %p191 = scmp.eq.s32.totalorder %s31, 0
      %p192 = por %p190, %p191
      %p193 = scmp.ne.s32.totalorder %s181, %s182
      %p194 = scmp.eq.s32.totalorder %s32, 3
      %p195 = por %p193, %p194
      %p197 = scmp.ne.s32.totalorder %s182, %s196
      %p198 = scmp.eq.s32.totalorder %s32, 0
      %p199 = por %p197, %p198
      %s200 = ssub.s32 %s33, %s45
      %s201 = ssub.s32 %s34, %s41
      %s202 = sor.u32 %s200, %s201
      %p203 = scmp.eq.s32.totalorder %s202, 0
      %s205 = sadd.s32 %s204, 1
      %s206 = scalar_select %p203, %s204, %s205
      %p209 = pneg %p203
      %p210 = scmp.eq.s32.totalorder %s26, 3
      %p211 = por %p209, %p210
      %p212 = scmp.ne.s32.totalorder %s204, %s207
      %p213 = scmp.eq.s32.totalorder %s26, 0
      %p214 = por %p212, %p213
      %p215 = scmp.ne.s32.totalorder %s204, %s207
      %p216 = scmp.eq.s32.totalorder %s31, 3
      %p217 = por %p215, %p216
      %p218 = scmp.ne.s32.totalorder %s207, %s208
      %p219 = scmp.eq.s32.totalorder %s31, 0
      %p220 = por %p218, %p219
      %p221 = scmp.ne.s32.totalorder %s207, %s208
      %p222 = scmp.eq.s32.totalorder %s32, 3
      %p223 = por %p221, %p222
      %p225 = scmp.ne.s32.totalorder %s208, %s224
      %p226 = scmp.eq.s32.totalorder %s32, 0
      %p227 = por %p225, %p226
      %p228 = scmp.le.s32.totalorder 1, %s26
      %p229 = scmp.lt.s32.totalorder %s26, 5
      %p230 = pnand %p228, %p229
      %p231 = pneg %p230
      // Predicated region
      $region9: #{tpu_custom_call.1} parent=5 // pred_check
        _
      $region10: #{tpu_custom_call.1} parent=5 // pred_check_branch
        %233 = sbr.rel (%p230) target = $region12
      $region11: #{tpu_custom_call.1} parent=5 // pred_region
        %s234 = ssub.s32 %s26, 1
        // Predicated region
        $region13: #{tpu_custom_call.1} parent=11 // pred_check
          %p235 = pneg %p87
        $region14: #{tpu_custom_call.1} parent=11 // pred_check_branch
          %237 = sbr.rel (%p235) target = $region16
        $region15: #{tpu_custom_call.1} parent=11 // pred_region
          _
        $region16: #{tpu_custom_call.1} parent=11 // pred_fallthru
          _
        // Predicated region
        $region17: #{tpu_custom_call.1} parent=11 // pred_check
          %p238 = pneg %p108
        $region18: #{tpu_custom_call.1} parent=11 // pred_check_branch
          %240 = sbr.rel (%p238) target = $region20
        $region19: #{tpu_custom_call.1} parent=11 // pred_region
          _
        $region20: #{tpu_custom_call.1} parent=11 // pred_fallthru
          _
        // Predicated region
        $region21: #{tpu_custom_call.1} parent=11 // pred_check
          %p241 = pneg %p129
        $region22: #{tpu_custom_call.1} parent=11 // pred_check_branch
          %243 = sbr.rel (%p241) target = $region24
        $region23: #{tpu_custom_call.1} parent=11 // pred_region
          _
        $region24: #{tpu_custom_call.1} parent=11 // pred_fallthru
          _
        // Predicated region
        $region25: #{tpu_custom_call.1} parent=11 // pred_check
          %p244 = pneg %p150
        $region26: #{tpu_custom_call.1} parent=11 // pred_check_branch
          %246 = sbr.rel (%p244) target = $region28
        $region27: #{tpu_custom_call.1} parent=11 // pred_region
          _
        $region28: #{tpu_custom_call.1} parent=11 // pred_fallthru
          _
        // Predicated region
        $region29: #{tpu_custom_call.1} parent=11 // pred_check
          %p247 = pneg %p171
        $region30: #{tpu_custom_call.1} parent=11 // pred_check_branch
          %249 = sbr.rel (%p247) target = $region32
        $region31: #{tpu_custom_call.1} parent=11 // pred_region
          %251 = vsyncadd [#allocation5], 0
          %s252 = sshll.u32 %s6, 4
          %s253 = int_to_ptr.hbm [resolvable:$true] %s252
          %s254 = sshll.u32 [#allocation4], 4
          %s255 = int_to_ptr.vmem [resolvable:$true] %s254
          %260 = dma.hbm_to_vmem [thread:$0]  %s253, 2048, %s255, [#allocation5], 128, 128, 8
        $region32: #{tpu_custom_call.1} parent=11 // pred_fallthru
          _
        // Predicated region
        $region33: #{tpu_custom_call.1} parent=11 // pred_check
          %p261 = pneg %p192
        $region34: #{tpu_custom_call.1} parent=11 // pred_check_branch
          %263 = sbr.rel (%p261) target = $region36
        $region35: #{tpu_custom_call.1} parent=11 // pred_region
          _
        $region36: #{tpu_custom_call.1} parent=11 // pred_fallthru
          _
      $region12: #{tpu_custom_call.1} parent=5 // pred_fallthru
        _
      %p264 = scmp.lt.s32.totalorder %s26, 4
      // Predicated region
      $region37: #{tpu_custom_call.1} parent=5 // pred_check
        %p265 = pneg %p264
      $region38: #{tpu_custom_call.1} parent=5 // pred_check_branch
        %267 = sbr.rel (%p265) target = $region40
      $region39: #{tpu_custom_call.1} parent=5 // pred_region
        // Predicated region
        $region41: #{tpu_custom_call.1} parent=39 // pred_check
          %p268 = pneg %p60
        $region42: #{tpu_custom_call.1} parent=39 // pred_check_branch
          %270 = sbr.rel (%p268) target = $region44
        $region43: #{tpu_custom_call.1} parent=39 // pred_region
          %p271 = scmp.lt.s32.totalorder %s33, 1
          %s272 = scalar_select %p271, %s33, 1
          %p273 = scmp.lt.s32.totalorder %s34, 1
          %s274 = scalar_select %p273, %s34, 1
          %s275 = smul.addr %s272, 2
          %s276 = sadd.s32 %s274, %s275
          %s277 = smul.addr %s276, 8
          %s278 = scalar_lea.vmem %s1, %s277
        $region44: #{tpu_custom_call.1} parent=39 // pred_fallthru
          _
      $region40: #{tpu_custom_call.1} parent=5 // pred_fallthru
        _
      %p279 = scmp.le.s32.totalorder 1, %s26
      %p280 = scmp.lt.s32.totalorder %s26, 5
      %p281 = pnand %p279, %p280
      %p282 = pneg %p281
      // Predicated region
      $region45: #{tpu_custom_call.1} parent=5 // pred_check
        _
      $region46: #{tpu_custom_call.1} parent=5 // pred_check_branch
        %284 = sbr.rel (%p281) target = $region48
      $region47: #{tpu_custom_call.1} parent=5 // pred_region
        %s285 = ssub.s32 %s26, 1
        // Predicated region
        $region49: #{tpu_custom_call.1} parent=47 // pred_check
          %p286 = pneg %p171
        $region50: #{tpu_custom_call.1} parent=47 // pred_check_branch
          %288 = sbr.rel (%p286) target = $region52
        $region51: #{tpu_custom_call.1} parent=47 // pred_region
          %290 = dma.done [#allocation5], 2048
        $region52: #{tpu_custom_call.1} parent=47 // pred_fallthru
          _
        %p291 = scmp.lt.s32.totalorder %s35, 1
        %s292 = scalar_select %p291, %s35, 1
        %p293 = scmp.lt.s32.totalorder %s36, 1
        %s294 = scalar_select %p293, %s36, 1
        %s295 = smul.addr %s292, 2
        %s296 = sadd.s32 %s294, %s295
        %s297 = smul.addr %s296, 8
        %s298 = scalar_lea.vmem %s1, %s297
        %p299 = pneg %p66
        %p300 = pneg %p63
        %p301 = pneg %p87
        %p302 = pneg %p84
        %p303 = pneg %p108
        %p304 = pneg %p105
        %p305 = pneg %p129
        %p306 = pneg %p126
        %p307 = pneg %p150
        %p308 = pneg %p147
        %p309 = pneg %p171
        %p310 = pneg %p168
        %p311 = pneg %p192
        %p312 = pneg %p189
        %p313 = pneg %p220
        %p314 = pneg %p217
        %s315 = sand.u32 %s207, 1
        %s316 = scalar_lea.sflag [#allocation6], %s315
        %s317 = sand.u32 %s207, 1
        %s318 = smul.addr %s317, 16
        %s319 = scalar_lea.vmem [#allocation7], %s318
        %p320 = scmp.lt.s32.totalorder %s35, 1
        %s321 = scalar_select %p320, %s35, 1
        %p322 = scmp.lt.s32.totalorder %s36, 1
        %s323 = scalar_select %p322, %s36, 1
        %s324 = smul.addr %s321, 2
        %s325 = sadd.s32 %s323, %s324
        %s326 = smul.addr %s325, 8
        %s327 = scalar_lea.vmem %s1, %s326
        %s329 = smul.u32 %s36, 8
        %s330 = sld [smem:[#allocation3 + %s35]]
        %p331 = scmp.lt.s32.totalorder %s329, %s330
        // Predicated region
        $region53: #{tpu_custom_call.1} parent=47 // pred_check
          %p332 = pneg %p331
        $region54: #{tpu_custom_call.1} parent=47 // pred_check_branch
          %334 = sbr.rel (%p332) target = $region56
        $region55: #{tpu_custom_call.1} parent=47 // pred_region
          %v335 = vld [vmem:[%s327] sm:$0xff]
          %v336 = vld [vmem:[%s2] sm:$0x1]
          %338 = vset.pattern.permute.xlu0 0
          %339 = vperm.xlu0 %338, %v335
          %v340 = vpop.permute.xlu0 %339
          %v342 = vperm.slane %v336, 0
          %v343 = vmul.f32 %v340, %v342
          %v344 = vld [vmem:[%s2 + $0x1] sm:$0x1]
          %345 = vset.pattern.permute.xlu0 1
          %346 = vperm.xlu0 %345, %v335
          %v347 = vpop.permute.xlu0 %346
          %v349 = vperm.slane %v344, 0
          %v350 = vmul.f32 %v347, %v349
          %v351 = vadd.f32 %v343, %v350
          %v352 = vld [vmem:[%s2 + $0x2] sm:$0x1]
          %353 = vset.pattern.permute.xlu0 2
          %354 = vperm.xlu0 %353, %v335
          %v355 = vpop.permute.xlu0 %354
          %v357 = vperm.slane %v352, 0
          %v358 = vmul.f32 %v355, %v357
          %v359 = vadd.f32 %v351, %v358
          %v360 = vld [vmem:[%s3] sm:$0x1]
          %v362 = vperm.slane %v360, 0
          %v364 = vadd.f32 %v359, %v362
          %v365 = vmax.f32 %v364, 0.0
          %v366 = vpack.c.bf16 %v365, %v365
          %v367 = vld [vmem:[%s4] sm:$0xf]
          %v368 = vld [vmem:[%s4 + $0x4] sm:$0xf]
          %v369 = vld [vmem:[%s4 + $0x8] sm:$0xf]
          %v370 = vld [vmem:[%s4 + $0xc] sm:$0xf]
          %v371 = vld [vmem:[%s4 + $0x10] sm:$0xf]
          %v372 = vld [vmem:[%s4 + $0x14] sm:$0xf]
          %v373 = vld [vmem:[%s4 + $0x18] sm:$0xf]
          %v374 = vld [vmem:[%s4 + $0x1c] sm:$0xf]
          %v375 = vld [vmem:[%s5] sm:$0x1]
          %v377 = vperm.slane %v375, 0
          %v387 = vunpack.c.l.b16 %v367
          %v388 = vunpack.c.l.b16 %v368
          %v389 = vunpack.c.l.b16 %v369
          %v390 = vunpack.c.l.b16 %v370
          %v391 = vunpack.c.l.b16 %v371
          %v392 = vunpack.c.l.b16 %v372
          %v393 = vunpack.c.l.b16 %v373
          %v394 = vunpack.c.l.b16 %v374
          %v395 = vpack.c.b16 %v388, %v387
          %v396 = vpack.c.b16 %v390, %v389
          %v397 = vpack.c.b16 %v392, %v391
          %v398 = vpack.c.b16 %v394, %v393
          %vm403 = vcmask 523264
          %v405 = vsel %vm403, %v366, 0
          %407 = vmatpush.bf16.msra.mxu0 0
          %408 = vmatpush.bf16.msra.mxu0 0
          %409 = vmatpush.bf16.msra.mxu0 0
          %410 = vmatpush.bf16.msra.mxu0 0
          %411 = vmatpush.bf16.msra.mxu0 %v398
          %412 = vmatpush.bf16.msra.mxu0 %v397
          %413 = vmatpush.bf16.msra.mxu0 %v396
          %414 = vmatpush.bf16.msra.mxu0 %v395
          %415 = vmatmul.bf16.gmra.mxu0 %v405
          %v416 = vpop.f32.mrf.mxu0
          %v417 = vadd.f32 %v377, %v416
          %v418 = vpop.f32.mrf.mxu0
          %419 = vdwg.mxu0
          %v420 = vmax.f32 %v417, 0.0
          %v421 = vpack.c.bf16 %v420, %v420
          %v422 = vld [vmem:[#allocation4] sm:$0xff]
          %v423 = vld [vmem:[#allocation4 + $0x8] sm:$0xff]
          %v424 = vld [vmem:[#allocation4 + $0x10] sm:$0xff]
          %v425 = vld [vmem:[#allocation4 + $0x18] sm:$0xff]
          %v426 = vld [vmem:[#allocation4 + $0x20] sm:$0xff]
          %v427 = vld [vmem:[#allocation4 + $0x28] sm:$0xff]
          %v428 = vld [vmem:[#allocation4 + $0x30] sm:$0xff]
          %v429 = vld [vmem:[#allocation4 + $0x38] sm:$0xff]
          %v430 = vld [vmem:[#allocation4 + $0x40] sm:$0xff]
          %v431 = vld [vmem:[#allocation4 + $0x48] sm:$0xff]
          %v432 = vld [vmem:[#allocation4 + $0x50] sm:$0xff]
          %v433 = vld [vmem:[#allocation4 + $0x58] sm:$0xff]
          %v434 = vld [vmem:[#allocation4 + $0x60] sm:$0xff]
          %v435 = vld [vmem:[#allocation4 + $0x68] sm:$0xff]
          %v436 = vld [vmem:[#allocation4 + $0x70] sm:$0xff]
          %v437 = vld [vmem:[#allocation4 + $0x78] sm:$0xff]
          %v438 = vld [vmem:[%s7] sm:$0x3]
          %v440 = vperm.slane %v438, 0
          %v441 = vperm.slane %v438, 1
          %v460 = vunpack.c.l.b16 %v422
          %v461 = vunpack.c.h.b16 %v422
          %v462 = vunpack.c.l.b16 %v423
          %v463 = vunpack.c.h.b16 %v423
          %v464 = vunpack.c.l.b16 %v424
          %v465 = vunpack.c.h.b16 %v424
          %v466 = vunpack.c.l.b16 %v425
          %v467 = vunpack.c.h.b16 %v425
          %v468 = vunpack.c.l.b16 %v426
          %v469 = vunpack.c.h.b16 %v426
          %v470 = vunpack.c.l.b16 %v427
          %v471 = vunpack.c.h.b16 %v427
          %v472 = vunpack.c.l.b16 %v428
          %v473 = vunpack.c.h.b16 %v428
          %v474 = vunpack.c.l.b16 %v429
          %v475 = vunpack.c.h.b16 %v429
          %v476 = vunpack.c.l.b16 %v430
          %v477 = vunpack.c.h.b16 %v430
          %v478 = vunpack.c.l.b16 %v431
          %v479 = vunpack.c.h.b16 %v431
          %v480 = vunpack.c.l.b16 %v432
          %v481 = vunpack.c.h.b16 %v432
          %v482 = vunpack.c.l.b16 %v433
          %v483 = vunpack.c.h.b16 %v433
          %v484 = vunpack.c.l.b16 %v434
          %v485 = vunpack.c.h.b16 %v434
          %v486 = vunpack.c.l.b16 %v435
          %v487 = vunpack.c.h.b16 %v435
          %v488 = vunpack.c.l.b16 %v436
          %v489 = vunpack.c.h.b16 %v436
          %v490 = vunpack.c.l.b16 %v437
          %v491 = vunpack.c.h.b16 %v437
          %v492 = vpack.c.b16 %v462, %v460
          %v493 = vpack.c.b16 %v463, %v461
          %v494 = vpack.c.b16 %v466, %v464
          %v495 = vpack.c.b16 %v467, %v465
          %v496 = vpack.c.b16 %v470, %v468
          %v497 = vpack.c.b16 %v471, %v469
          %v498 = vpack.c.b16 %v474, %v472
          %v499 = vpack.c.b16 %v475, %v473
          %v500 = vpack.c.b16 %v478, %v476
          %v501 = vpack.c.b16 %v479, %v477
          %v502 = vpack.c.b16 %v482, %v480
          %v503 = vpack.c.b16 %v483, %v481
          %v504 = vpack.c.b16 %v486, %v484
          %v505 = vpack.c.b16 %v487, %v485
          %v506 = vpack.c.b16 %v490, %v488
          %v507 = vpack.c.b16 %v491, %v489
          %524 = vmatpush.bf16.msra.mxu0 %v506
          %525 = vmatpush.bf16.msra.mxu0 %v504
          %526 = vmatpush.bf16.msra.mxu0 %v502
          %527 = vmatpush.bf16.msra.mxu0 %v500
          %528 = vmatpush.bf16.msra.mxu0 %v498
          %529 = vmatpush.bf16.msra.mxu0 %v496
          %530 = vmatpush.bf16.msra.mxu0 %v494
          %531 = vmatpush.bf16.msra.mxu0 %v492
          %532 = vmatmul.bf16.gmra.mxu0 %v421
          %v533 = vpop.f32.mrf.mxu0
          %v534 = vadd.f32 %v440, %v533
          %v535 = vpop.f32.mrf.mxu0
          %536 = vdwg.mxu0
          %537 = vmatpush.bf16.msra.mxu0 %v507
          %538 = vmatpush.bf16.msra.mxu0 %v505
          %539 = vmatpush.bf16.msra.mxu0 %v503
          %540 = vmatpush.bf16.msra.mxu0 %v501
          %541 = vmatpush.bf16.msra.mxu0 %v499
          %542 = vmatpush.bf16.msra.mxu0 %v497
          %543 = vmatpush.bf16.msra.mxu0 %v495
          %544 = vmatpush.bf16.msra.mxu0 %v493
          %545 = vmatmul.bf16.gmra.mxu0 %v421
          %v546 = vpop.f32.mrf.mxu0
          %v547 = vadd.f32 %v441, %v546
          %v548 = vpop.f32.mrf.mxu0
          %549 = vdwg.mxu0
          %v550 = vlaneseq
          %v551 = vshrl.u32 %v550, 7
          %v552 = vstv %s329
          %v553 = vadd.s32 %v551, %v552
          %v554 = vstv %s330
          %vm555 = vcmp.lt.s32.totalorder %v553, %v554
          %v556 = vsel %vm555, 1, 0
          %vm557 = vcmp.eq.s32.totalorder %v556, 1
          %v558 = vsel %vm557, %v534, 0.0
          %v559 = vsel %vm557, %v547, 0.0
          %560 = vst [vmem:[%s319] sm:$0xff] %v558
          %561 = vst [vmem:[%s319 + $0x8] sm:$0xff] %v559
        $region56: #{tpu_custom_call.1} parent=47 // pred_fallthru
          _
        %p562 = scmp.ge.s32.totalorder %s329, %s330
        // Predicated region
        $region57: #{tpu_custom_call.1} parent=47 // pred_check
          %p563 = pneg %p562
        $region58: #{tpu_custom_call.1} parent=47 // pred_check_branch
          %565 = sbr.rel (%p563) target = $region60
        $region59: #{tpu_custom_call.1} parent=47 // pred_region
          %566 = vst [vmem:[%s319] sm:$0xff] 0.0
          %567 = vst [vmem:[%s319 + $0x8] sm:$0xff] 0.0
        $region60: #{tpu_custom_call.1} parent=47 // pred_fallthru
          _
        %s568 = sand.u32 %s207, 1
        %s569 = scalar_lea.sflag [#allocation6], %s568
        %s570 = sand.u32 %s207, 1
        %s571 = smul.addr %s570, 16
        %s572 = scalar_lea.vmem [#allocation7], %s571
        // Predicated region
        $region61: #{tpu_custom_call.1} parent=47 // pred_check
          %p573 = pneg %p217
        $region62: #{tpu_custom_call.1} parent=47 // pred_check_branch
          %575 = sbr.rel (%p573) target = $region64
        $region63: #{tpu_custom_call.1} parent=47 // pred_region
          %577 = vsyncadd %s569, 0
          %s578 = smul.addr %s36, 2
          %s579 = smul.addr %s35, 4
          %s580 = sadd.s32 %s578, %s579
          %s581 = smul.addr %s580, 8
          %s582 = scalar_lea.hbm %s8, %s581
          %s584 = sshll.u32 %s572, 4
          %s585 = int_to_ptr.vmem [resolvable:$true] %s584
          %s586 = sshll.u32 %s582, 4
          %s587 = int_to_ptr.hbm [resolvable:$true] %s586
          %589 = dma.vmem_to_hbm [thread:$0]  %s585, 256, %s587, %s569
        $region64: #{tpu_custom_call.1} parent=47 // pred_fallthru
          _
      $region48: #{tpu_custom_call.1} parent=5 // pred_fallthru
        _
      %p590 = scmp.le.s32.totalorder 2, %s26
      // Predicated region
      $region65: #{tpu_custom_call.1} parent=5 // pred_check
        %p591 = pneg %p590
      $region66: #{tpu_custom_call.1} parent=5 // pred_check_branch
        %593 = sbr.rel (%p591) target = $region68
      $region67: #{tpu_custom_call.1} parent=5 // pred_region
        %s594 = ssub.s32 %s26, 2
        // Predicated region
        $region69: #{tpu_custom_call.1} parent=67 // pred_check
          %p595 = pneg %p223
        $region70: #{tpu_custom_call.1} parent=67 // pred_check_branch
          %597 = sbr.rel (%p595) target = $region72
        $region71: #{tpu_custom_call.1} parent=67 // pred_region
          %s598 = sand.u32 %s208, 1
          %s599 = scalar_lea.sflag [#allocation6], %s598
          %s600 = sand.u32 %s208, 1
          %s601 = smul.addr %s600, 16
          %s602 = scalar_lea.vmem [#allocation7], %s601
          %604 = dma.done %s599, 256
        $region72: #{tpu_custom_call.1} parent=67 // pred_fallthru
          _
      $region68: #{tpu_custom_call.1} parent=5 // pred_fallthru
        _
    $region6: #{tpu_custom_call.1} parent=1 // loop_footer
      %s30 = sadd.s32 1, %s26
    $region7: #{tpu_custom_call.1} parent=1 // loop_footer_branch
      %25 = sbr.rel target = $region3
    $region8: #{tpu_custom_call.1} parent=1 // loop_exit
      _
    %605 = vsyncpa [#allocation5], 1
    %s606 = scalar_lea.sflag [#allocation5], 1
    %607 = vsyncpa %s606, 1
    %608 = vsyncpa [#allocation6], 1
    %s609 = scalar_lea.sflag [#allocation6], 1
    %610 = vsyncpa %s609, 1

</llo_original>
